<compile_context>
chip_gen: v7x
topology: tpu7x:2x2x1
jax: 0.10.0
libtpu: 0.0.40
codegen_flags: <defaults>
</compile_context>

<pallas_src>
import functools

import jax
import jax.numpy as jnp
from jax.experimental import pallas as pl
from jax.experimental.pallas import tpu as pltpu

LANE = 128            # pad hidden feature dims to multiples of this (lane-dense matmuls)
SUBLANE = 8           # f32 sublane granularity
TM_MAX = 512          # row-tile cap
TARGET_GRID_STEPS = 8 # aim for ~8 row tiles so both v7x TCs get work and pipelining kicks in


def _round_up(x, m):
    return (x + m - 1) // m * m


# ----------------------------------------------------------------------------
# Pallas kernel: fused MLP (chain of Linear + PLIF spike, final Linear plain)
# ----------------------------------------------------------------------------
def _fused_mlp_kernel(*refs, num_layers, out_dim, weight_dtypes):
    # refs = (x_ref,
    #         [w_i_ref, th_i_ref]  for each hidden layer i,
    #         w_last_ref, b_last_ref,
    #         o_ref)
    # x_ref : (TM, Din)   w_i : (Kip, Nip)   th_i : (1, Nip)   b_last : (1, out_dim)
    # o_ref : (TM, out_dim)   (unpadded output block; last dim == full array dim)
    x_ref = refs[0]
    o_ref = refs[-1]

    h = x_ref[...]
    if h.dtype != weight_dtypes[0]:
        h = h.astype(weight_dtypes[0])   # only cast on the bf16 path, in-VMEM, no HBM cost

    r = 1
    for i in range(num_layers - 1):
        w_ref, th_ref = refs[r], refs[r + 1]
        r += 2
        y = jnp.dot(h, w_ref[...], preferred_element_type=jnp.float32)
        # PLIF single step from v=0 with bias folded into the per-channel threshold:
        #   spike = (decay*(y+b) >= v_th)  ==  (y >= v_th/decay - b)
        # Padded channels: zero weights -> y=0 < v_th/decay -> spike=0 (inert padding).
        # Spike cast straight to the next layer's weight dtype (no f32 round-trip).
        h = (y >= th_ref[...]).astype(weight_dtypes[i + 1])

    w_ref, b_ref = refs[r], refs[r + 1]
    y = jnp.dot(h, w_ref[...], preferred_element_type=jnp.float32)
    # Final matmul runs on the 128-lane-padded MXU tile; store only the real lanes.
    o_ref[...] = (y[:, :out_dim] + b_ref[...]).astype(o_ref.dtype)


# ----------------------------------------------------------------------------
# Parameter init (matches nn.Linear default init range; PLIF defaults)
# ----------------------------------------------------------------------------
def init_mlp_params(key, input_dim, hidden_dim, output_dim, num_layers):
    h = [hidden_dim] * (num_layers - 1)
    dims_in = [input_dim] + h
    dims_out = h + [output_dim]
    params = []
    for n, k in zip(dims_in, dims_out):
        key, kw, kb = jax.random.split(key, 3)
        bound = 1.0 / jnp.sqrt(n)
        w = jax.random.uniform(kw, (k, n), jnp.float32, -bound, bound)  # (out, in)
        b = jax.random.uniform(kb, (k,), jnp.float32, -bound, bound)
        params.append((jnp.asarray(w.T), b))  # store transposed (in, out)
    # ParametricLIFNode: init_tau=2.0 -> sigmoid(0)=0.5 decay ; v_threshold=1.0
    plif_decay = [0.5] * (num_layers - 1)
    plif_vth = [1.0] * (num_layers - 1)
    return params, plif_decay, plif_vth


# ----------------------------------------------------------------------------
# Wrapper: single fused pallas_call, unpadded I/O, lane-dense internal matmuls
# ----------------------------------------------------------------------------
def mlp_forward(x, params, plif_decay, plif_vth, *,
                compute_dtype=jnp.float32, tm_max=TM_MAX,
                single_buffer_weights=False):
    B, S, Din = x.shape
    M = B * S
    num_layers = len(params)
    Nout = params[-1][0].shape[1]
    compute_dtype = jnp.dtype(compute_dtype)

    for d in plif_decay:
        assert d > 0.0, "threshold folding requires decay > 0"
    base_th = [float(v) / float(d) for v, d in zip(plif_vth, plif_decay)]
    for t in base_th:
        assert t > 0.0, "inert channel padding requires v_th/decay > 0"

    # --- padded layer geometry: hidden widths -> multiples of 128; first K = Din (unpadded) ---
    kp_list, np_list = [], []
    kp = Din
    for (w_t, _b) in params:
        _k, n = w_t.shape
        np_ = _round_up(n, LANE)
        kp_list.append(kp)
        np_list.append(np_)
        kp = np_

    # --- build weight / threshold / bias operands (weights in compute_dtype, incl. final layer) ---
    weight_inputs = []
    weight_dtypes = []
    for i, (w_t, b) in enumerate(params):
        k, n = w_t.shape
        kp_i, np_i = kp_list[i], np_list[i]
        w_p = jnp.zeros((kp_i, np_i), jnp.float32).at[:k, :n].set(w_t).astype(compute_dtype)
        weight_dtypes.append(compute_dtype)
        if i < num_layers - 1:
            # per-channel folded threshold (f32): v_th/decay - b ; padded channels keep v_th/decay > 0
            th = jnp.full((1, np_i), base_th[i], jnp.float32).at[0, :n].add(-b)
            weight_inputs += [w_p, th]
        else:
            b_p = b.reshape(1, n).astype(jnp.float32)   # final bias stays f32, unpadded
            weight_inputs += [w_p, b_p]

    # --- row tiling: ensure >= 2 grid steps, cap at tm_max; ragged last block is fine (row-wise op) ---
    TM = max(SUBLANE, min(tm_max, _round_up(max(1, pl.cdiv(M, TARGET_GRID_STEPS)), SUBLANE)))
    grid = (pl.cdiv(M, TM),)

    # --- specs: x and out tiled over rows (features unpadded: last dim == full array dim is legal);
    #     weights/thresholds/bias are small, constant-index, resident every step ---
    w_kwargs = dict(pipeline_mode=pl.Buffered(1)) if single_buffer_weights else {}
    in_specs = [pl.BlockSpec((TM, Din), lambda i: (i, 0))]
    for i in range(num_layers):
        kp_i, np_i = kp_list[i], np_list[i]
        in_specs.append(pl.BlockSpec((kp_i, np_i), lambda i: (0, 0), **w_kwargs))
        vec_w = np_i if i < num_layers - 1 else Nout
        in_specs.append(pl.BlockSpec((1, vec_w), lambda i: (0, 0), **w_kwargs))
    out_specs = pl.BlockSpec((TM, Nout), lambda i: (i, 0))

    # --- VMEM budget (double-buffered streamed blocks, wb-buffered weights) ---
    wb = 1 if single_buffer_weights else 2
    vmem_bytes = 2 * TM * Din * x.dtype.itemsize + 2 * TM * Nout * 4
    for i in range(num_layers):
        kp_i, np_i = kp_list[i], np_list[i]
        vmem_bytes += wb * kp_i * np_i * compute_dtype.itemsize
        vmem_bytes += wb * (np_i if i < num_layers - 1 else Nout) * 4
    vmem_limit = int(min(max(2 * vmem_bytes + (4 << 20), 16 << 20), 48 << 20))

    # --- advisory cost estimate (only the bytes that actually hit HBM) ---
    flops = 0
    bytes_accessed = M * Din * x.dtype.itemsize + M * Nout * 4
    for i in range(num_layers):
        kp_i, np_i = kp_list[i], np_list[i]
        flops += 2 * M * kp_i * np_i
        bytes_accessed += kp_i * np_i * compute_dtype.itemsize + np_i * 4
    cost = pl.CostEstimate(flops=flops, transcendentals=0, bytes_accessed=bytes_accessed)

    kernel = functools.partial(_fused_mlp_kernel, num_layers=num_layers,
                               out_dim=Nout, weight_dtypes=tuple(weight_dtypes))

    out = pl.pallas_call(
        kernel,
        out_shape=jax.ShapeDtypeStruct((M, Nout), jnp.float32),
        grid=grid,
        in_specs=in_specs,
        out_specs=out_specs,
        compiler_params=pltpu.CompilerParams(
            dimension_semantics=("parallel",),     # megacore-shardable row tiles on v7x
            vmem_limit_bytes=vmem_limit),
        cost_estimate=cost,
    )(x.reshape(M, Din), *weight_inputs)

    return out.reshape(B, S, Nout)


# ----------------------------------------------------------------------------
# Pure-JAX reference (f32, unpadded, unfolded PLIF math)
# ----------------------------------------------------------------------------
def mlp_reference(x, params, plif_decay, plif_vth):
    B, S, D = x.shape
    h = x.reshape(B * S, D)
    num_layers = len(params)
    for i, (w_t, b) in enumerate(params):
        h = jnp.dot(h, w_t, precision=jax.lax.Precision.HIGHEST) + b
        if i < num_layers - 1:
            h = (plif_decay[i] * h >= plif_vth[i]).astype(jnp.float32)
    return h.reshape(B, S, -1)


if __name__ == "__main__":
    # Small DETR-bbox-head-like configuration.
    B, S = 2, 8
    input_dim, hidden_dim, output_dim, num_layers = 32, 32, 4, 3

    key = jax.random.PRNGKey(0)
    kx, kp = jax.random.split(key)
    x = jax.random.normal(kx, (B, S, input_dim), jnp.float32)

    params, plif_decay, plif_vth = init_mlp_params(
        kp, input_dim, hidden_dim, output_dim, num_layers)

    ref = mlp_reference(x, params, plif_decay, plif_vth)

    # f32 path: strict check against the pure-JAX reference.
    out = mlp_forward(x, params, plif_decay, plif_vth, compute_dtype=jnp.float32)
    out = jax.block_until_ready(out)
    assert out.shape == (B, S, output_dim), out.shape
    assert jnp.max(jnp.abs(out - ref)) < 1e-3, float(jnp.max(jnp.abs(out - ref)))

    # bf16 compute path (halved weight/spike bytes, bf16 MXU rate on v6e/v7x).
    # Loose tolerance: bf16 rounding can flip a rare near-threshold spike (bounded effect).
    out_bf16 = mlp_forward(x, params, plif_decay, plif_vth, compute_dtype=jnp.bfloat16)
    out_bf16 = jax.block_until_ready(out_bf16)
    assert out_bf16.shape == (B, S, output_dim), out_bf16.shape
    assert bool(jnp.all(jnp.isfinite(out_bf16)))
    assert float(jnp.max(jnp.abs(out_bf16 - ref))) < 0.3

    print("KERNEL_OK")
</pallas_src>

<mosaic_0001>
module attributes {stable_mosaic.version = 11 : i64} {
  func.func @_fused_mlp_kernel(%arg0: i32, %arg1: memref<8x32xf32, #tpu.memory_space<vmem>>, %arg2: memref<32x128xf32, #tpu.memory_space<vmem>>, %arg3: memref<1x128xf32, #tpu.memory_space<vmem>>, %arg4: memref<128x128xf32, #tpu.memory_space<vmem>>, %arg5: memref<1x128xf32, #tpu.memory_space<vmem>>, %arg6: memref<128x128xf32, #tpu.memory_space<vmem>>, %arg7: memref<1x4xf32, #tpu.memory_space<vmem>>, %arg8: memref<8x4xf32, #tpu.memory_space<vmem>>) attributes {dimension_semantics = [#tpu.dimension_semantics<parallel>], iteration_bounds = array<i64: 2>, scalar_prefetch = 0 : i64, scratch_operands = 0 : i64, tpu.core_type = #tpu.core_type<tc>, window_params = [{transform_indices = @transform_0, window_bounds = array<i64: 8, 32>}, {pipeline_mode = #tpu.pipeline_mode<synchronous>, transform_indices = @transform_1, window_bounds = array<i64: 32, 128>}, {pipeline_mode = #tpu.pipeline_mode<synchronous>, transform_indices = @transform_2, window_bounds = array<i64: 1, 128>}, {pipeline_mode = #tpu.pipeline_mode<synchronous>, transform_indices = @transform_3, window_bounds = array<i64: 128, 128>}, {pipeline_mode = #tpu.pipeline_mode<synchronous>, transform_indices = @transform_4, window_bounds = array<i64: 1, 128>}, {pipeline_mode = #tpu.pipeline_mode<synchronous>, transform_indices = @transform_5, window_bounds = array<i64: 128, 128>}, {pipeline_mode = #tpu.pipeline_mode<synchronous>, transform_indices = @transform_6, window_bounds = array<i64: 1, 4>}, {transform_indices = @transform_7, window_bounds = array<i64: 8, 4>}]} {
    %c0 = arith.constant 0 : index
    %c0_0 = arith.constant 0 : index
    %0 = vector.load %arg1[%c0, %c0_0] : memref<8x32xf32, #tpu.memory_space<vmem>>, vector<8x32xf32>
    %c0_1 = arith.constant 0 : index
    %c0_2 = arith.constant 0 : index
    %1 = vector.load %arg2[%c0_1, %c0_2] : memref<32x128xf32, #tpu.memory_space<vmem>>, vector<32x128xf32>
    %cst = arith.constant dense<0.000000e+00> : vector<8x128xf32>
    %2 = tpu.matmul %0, %1, %cst {dimension_numbers = #tpu.dot_dimension_numbers<[1], [0], [0], [1], [0, 0, 1, 1], [], []>} : vector<8x32xf32>, vector<32x128xf32>, vector<8x128xf32> -> vector<8x128xf32>
    %c0_3 = arith.constant 0 : index
    %c0_4 = arith.constant 0 : index
    %3 = vector.load %arg3[%c0_3, %c0_4] : memref<1x128xf32, #tpu.memory_space<vmem>>, vector<1x128xf32>
    %4 = vector.broadcast %3 : vector<1x128xf32> to vector<8x128xf32>
    %5 = arith.cmpf oge, %2, %4 : vector<8x128xf32>
    %6 = arith.extui %5 : vector<8x128xi1> to vector<8x128xi32>
    %7 = arith.sitofp %6 : vector<8x128xi32> to vector<8x128xf32>
    %c0_5 = arith.constant 0 : index
    %c0_6 = arith.constant 0 : index
    %8 = vector.load %arg4[%c0_5, %c0_6] : memref<128x128xf32, #tpu.memory_space<vmem>>, vector<128x128xf32>
    %cst_7 = arith.constant dense<0.000000e+00> : vector<8x128xf32>
    %9 = tpu.matmul %7, %8, %cst_7 {dimension_numbers = #tpu.dot_dimension_numbers<[1], [0], [0], [1], [0, 0, 1, 1], [], []>} : vector<8x128xf32>, vector<128x128xf32>, vector<8x128xf32> -> vector<8x128xf32>
    %c0_8 = arith.constant 0 : index
    %c0_9 = arith.constant 0 : index
    %10 = vector.load %arg5[%c0_8, %c0_9] : memref<1x128xf32, #tpu.memory_space<vmem>>, vector<1x128xf32>
    %11 = vector.broadcast %10 : vector<1x128xf32> to vector<8x128xf32>
    %12 = arith.cmpf oge, %9, %11 : vector<8x128xf32>
    %13 = arith.extui %12 : vector<8x128xi1> to vector<8x128xi32>
    %14 = arith.sitofp %13 : vector<8x128xi32> to vector<8x128xf32>
    %c0_10 = arith.constant 0 : index
    %c0_11 = arith.constant 0 : index
    %15 = vector.load %arg6[%c0_10, %c0_11] : memref<128x128xf32, #tpu.memory_space<vmem>>, vector<128x128xf32>
    %cst_12 = arith.constant dense<0.000000e+00> : vector<8x128xf32>
    %16 = tpu.matmul %14, %15, %cst_12 {dimension_numbers = #tpu.dot_dimension_numbers<[1], [0], [0], [1], [0, 0, 1, 1], [], []>} : vector<8x128xf32>, vector<128x128xf32>, vector<8x128xf32> -> vector<8x128xf32>
    %17 = vector.extract_strided_slice %16 {offsets = [0, 0], sizes = [8, 4], strides = [1, 1]} : vector<8x128xf32> to vector<8x4xf32>
    %c0_13 = arith.constant 0 : index
    %c0_14 = arith.constant 0 : index
    %18 = vector.load %arg7[%c0_13, %c0_14] : memref<1x4xf32, #tpu.memory_space<vmem>>, vector<1x4xf32>
    %19 = vector.broadcast %18 : vector<1x4xf32> to vector<8x4xf32>
    %20 = arith.addf %17, %19 : vector<8x4xf32>
    %c0_15 = arith.constant 0 : index
    %c0_16 = arith.constant 0 : index
    %21 = vector.load %arg8[%c0_15, %c0_16] : memref<8x4xf32, #tpu.memory_space<vmem>>, vector<8x4xf32>
    tpu.vector_store %arg8[%c0_15, %c0_16], %20 {strides = array<i32>} : memref<8x4xf32, #tpu.memory_space<vmem>>, vector<8x4xf32>,
    return
  }
  func.func @transform_0(%arg0: i32) -> (i32, i32) {
    %c0_i32 = arith.constant 0 : i32
    %c0_i32_0 = arith.constant 0 : i32
    return %arg0, %c0_i32 : i32, i32
  }
  func.func @transform_1(%arg0: i32) -> (i32, i32) {
    %c0_i32 = arith.constant 0 : i32
    %c0_i32_0 = arith.constant 0 : i32
    %c0_i32_1 = arith.constant 0 : i32
    return %c0_i32, %c0_i32_0 : i32, i32
  }
  func.func @transform_2(%arg0: i32) -> (i32, i32) {
    %c0_i32 = arith.constant 0 : i32
    %c0_i32_0 = arith.constant 0 : i32
    %c0_i32_1 = arith.constant 0 : i32
    return %c0_i32, %c0_i32_0 : i32, i32
  }
  func.func @transform_3(%arg0: i32) -> (i32, i32) {
    %c0_i32 = arith.constant 0 : i32
    %c0_i32_0 = arith.constant 0 : i32
    %c0_i32_1 = arith.constant 0 : i32
    return %c0_i32, %c0_i32_0 : i32, i32
  }
  func.func @transform_4(%arg0: i32) -> (i32, i32) {
    %c0_i32 = arith.constant 0 : i32
    %c0_i32_0 = arith.constant 0 : i32
    %c0_i32_1 = arith.constant 0 : i32
    return %c0_i32, %c0_i32_0 : i32, i32
  }
  func.func @transform_5(%arg0: i32) -> (i32, i32) {
    %c0_i32 = arith.constant 0 : i32
    %c0_i32_0 = arith.constant 0 : i32
    %c0_i32_1 = arith.constant 0 : i32
    return %c0_i32, %c0_i32_0 : i32, i32
  }
  func.func @transform_6(%arg0: i32) -> (i32, i32) {
    %c0_i32 = arith.constant 0 : i32
    %c0_i32_0 = arith.constant 0 : i32
    %c0_i32_1 = arith.constant 0 : i32
    return %c0_i32, %c0_i32_0 : i32, i32
  }
  func.func @transform_7(%arg0: i32) -> (i32, i32) {
    %c0_i32 = arith.constant 0 : i32
    %c0_i32_0 = arith.constant 0 : i32
    return %arg0, %c0_i32 : i32, i32
  }
}

</mosaic_0001>

<llo_original>
// kernel: tpu_custom_call.1
$region0: #{tpu_custom_call.1}
  #allocation0 [shape = 'u32[]', space=smem, size = 0x4, offset = 0x4, fixed_abs, tag = 'smem constant byte address 0x4 - core index']
  #allocation1 [shape = 'u32[144,128]{1,0:T(1,128)}', space=vmem, size = 0x12000, scoped, tag = 'internal scratch']
  %s0 = inlined_call_operand.hbm [shape: f32[16,32], index: 0, kind: input, shape index: {}]
  %s1 = inlined_call_operand.hbm [shape: f32[32,128], index: 1, kind: input, shape index: {}]
  %s2 = inlined_call_operand.vmem [shape: f32[1,128], index: 2, kind: input, shape index: {}]
  %s3 = inlined_call_operand.hbm [shape: f32[128,128], index: 3, kind: input, shape index: {}]
  %s4 = inlined_call_operand.vmem [shape: f32[1,128], index: 4, kind: input, shape index: {}]
  %s5 = inlined_call_operand.hbm [shape: f32[128,128], index: 5, kind: input, shape index: {}]
  %s6 = inlined_call_operand.vmem [shape: f32[1,4], index: 6, kind: input, shape index: {}]
  %s7 = inlined_call_operand.vmem [shape: f32[16,4], index: 7, kind: output, shape index: {}]
  %s8 = sld [smem:[#allocation0]]
  $region77: #{tpu_custom_call.1} parent=0
    _
  %s10 = ssub.s32 1, %s8
  %s11 = scalar_select 0, %s10, %s8
  $region1: #{tpu_custom_call.1} parent=0
    #allocation2 [shape = 'u8[8192]{0}', space=vmem, size = 0x2000, scoped, tag = 'input window, operand 0']
    #allocation3 [shape = 's32[2]{0}', space=sflag, size = 0x8, scoped, tag = 'scoped memory for tpu_custom_call.1']
    #allocation4 [shape = 'u8[16384]{0}', space=vmem, size = 0x4000, scoped, tag = 'input window, operand 1, single buffered']
    #allocation5 [shape = 's32[1]{0}', space=sflag, size = 0x4, scoped, tag = 'scoped memory for tpu_custom_call.1']
    #allocation6 [shape = 'u8[65536]{0}', space=vmem, size = 0x10000, scoped, tag = 'input window, operand 3, single buffered']
    #allocation7 [shape = 'u8[65536]{0}', space=vmem, size = 0x10000, scoped, tag = 'input window, operand 5, single buffered']
    #allocation8 [shape = 's32[1]{0}', space=sflag, size = 0x4, scoped, tag = 'scoped memory for tpu_custom_call.1']
    %12 = vsyncpa [#allocation3], 0
    %s13 = scalar_lea.sflag [#allocation3], 1
    %14 = vsyncpa %s13, 0
    %15 = vsyncpa [#allocation5], 0
    %16 = vsyncpa [#allocation8], 0
    loop: start=0, step=1, limit=4
    $region2: #{tpu_custom_call.1} parent=1 // loop_pre_header
      _
    $region3: #{tpu_custom_call.1} parent=1 // loop_header
      %s18 = sphi 0, %s22
      %p19 = scmp.ge.s32.totalorder %s18, 4
      %s28 = sphi 0, %s30
      %s31 = sphi 0, %s28
      %s32 = sphi 0, %s31
      %s48 = sphi 0, %s32
      %s52 = sphi 0, %s52
      %s54 = sphi 0, %s52
      %s55 = sphi 0, %s54
      %s69 = sphi 0, %s55
      %s73 = sphi 0, %s73
      %s75 = sphi 0, %s73
      %s76 = sphi 0, %s75
      %s90 = sphi 0, %s76
      %s94 = sphi 0, %s94
      %s96 = sphi 0, %s94
      %s97 = sphi 0, %s96
      %s111 = sphi 0, %s97
      %s115 = sphi 0, %s115
      %s117 = sphi 0, %s115
      %s118 = sphi 0, %s117
      %s132 = sphi 0, %s118
      %s136 = sphi 0, %s136
      %s138 = sphi 0, %s136
      %s139 = sphi 0, %s138
      %s153 = sphi 0, %s139
      %s157 = sphi 0, %s157
      %s159 = sphi 0, %s157
      %s160 = sphi 0, %s159
      %s174 = sphi 0, %s160
      %s180 = sphi 0, %s182
      %s183 = sphi 0, %s180
      %s184 = sphi 0, %s183
      %s200 = sphi 0, %s184
    $region4: #{tpu_custom_call.1} parent=1 // loop_header_branch
      %21 = sbr.rel (%p19) target = $region8
    $region5: #{tpu_custom_call.1} parent=1 // loop_body
      %s23 = ssub.s32 %s18, 1
      %s24 = ssub.s32 %s18, 2
      %s25 = sadd.s32 %s18, 1
      %s26 = ssub.s32 %s18, %s25
      %p27 = scmp.eq.s32.totalorder %s26, 0
      %s29 = sadd.s32 %s28, 1
      %s30 = scalar_select %p27, %s28, %s29
      %p33 = pneg %p27
      %p34 = scmp.eq.s32.totalorder %s18, 1
      %p35 = por %p33, %p34
      %p36 = scmp.ne.s32.totalorder %s28, %s31
      %p37 = scmp.eq.s32.totalorder %s18, 0
      %p38 = por %p36, %p37
      %p39 = scmp.ne.s32.totalorder %s28, %s31
      %p40 = scmp.eq.s32.totalorder %s23, 1
      %p41 = por %p39, %p40
      %p42 = scmp.ne.s32.totalorder %s31, %s32
      %p43 = scmp.eq.s32.totalorder %s23, 0
      %p44 = por %p42, %p43
      %p45 = scmp.ne.s32.totalorder %s31, %s32
      %p46 = scmp.eq.s32.totalorder %s24, 1
      %p47 = por %p45, %p46
      %p49 = scmp.ne.s32.totalorder %s32, %s48
      %p50 = scmp.eq.s32.totalorder %s24, 0
      %p51 = por %p49, %p50
      %s53 = sadd.s32 %s52, 1
      %p56 = scmp.eq.s32.totalorder %s18, 1
      %p57 = scmp.ne.s32.totalorder %s52, %s54
      %p58 = scmp.eq.s32.totalorder %s18, 0
      %p59 = por %p57, %p58
      %p60 = scmp.ne.s32.totalorder %s52, %s54
      %p61 = scmp.eq.s32.totalorder %s23, 1
      %p62 = por %p60, %p61
      %p63 = scmp.ne.s32.totalorder %s54, %s55
      %p64 = scmp.eq.s32.totalorder %s23, 0
      %p65 = por %p63, %p64
      %p66 = scmp.ne.s32.totalorder %s54, %s55
      %p67 = scmp.eq.s32.totalorder %s24, 1
      %p68 = por %p66, %p67
      %p70 = scmp.ne.s32.totalorder %s55, %s69
      %p71 = scmp.eq.s32.totalorder %s24, 0
      %p72 = por %p70, %p71
      %s74 = sadd.s32 %s73, 1
      %p77 = scmp.eq.s32.totalorder %s18, 1
      %p78 = scmp.ne.s32.totalorder %s73, %s75
      %p79 = scmp.eq.s32.totalorder %s18, 0
      %p80 = por %p78, %p79
      %p81 = scmp.ne.s32.totalorder %s73, %s75
      %p82 = scmp.eq.s32.totalorder %s23, 1
      %p83 = por %p81, %p82
      %p84 = scmp.ne.s32.totalorder %s75, %s76
      %p85 = scmp.eq.s32.totalorder %s23, 0
      %p86 = por %p84, %p85
      %p87 = scmp.ne.s32.totalorder %s75, %s76
      %p88 = scmp.eq.s32.totalorder %s24, 1
      %p89 = por %p87, %p88
      %p91 = scmp.ne.s32.totalorder %s76, %s90
      %p92 = scmp.eq.s32.totalorder %s24, 0
      %p93 = por %p91, %p92
      %s95 = sadd.s32 %s94, 1
      %p98 = scmp.eq.s32.totalorder %s18, 1
      %p99 = scmp.ne.s32.totalorder %s94, %s96
      %p100 = scmp.eq.s32.totalorder %s18, 0
      %p101 = por %p99, %p100
      %p102 = scmp.ne.s32.totalorder %s94, %s96
      %p103 = scmp.eq.s32.totalorder %s23, 1
      %p104 = por %p102, %p103
      %p105 = scmp.ne.s32.totalorder %s96, %s97
      %p106 = scmp.eq.s32.totalorder %s23, 0
      %p107 = por %p105, %p106
      %p108 = scmp.ne.s32.totalorder %s96, %s97
      %p109 = scmp.eq.s32.totalorder %s24, 1
      %p110 = por %p108, %p109
      %p112 = scmp.ne.s32.totalorder %s97, %s111
      %p113 = scmp.eq.s32.totalorder %s24, 0
      %p114 = por %p112, %p113
      %s116 = sadd.s32 %s115, 1
      %p119 = scmp.eq.s32.totalorder %s18, 1
      %p120 = scmp.ne.s32.totalorder %s115, %s117
      %p121 = scmp.eq.s32.totalorder %s18, 0
      %p122 = por %p120, %p121
      %p123 = scmp.ne.s32.totalorder %s115, %s117
      %p124 = scmp.eq.s32.totalorder %s23, 1
      %p125 = por %p123, %p124
      %p126 = scmp.ne.s32.totalorder %s117, %s118
      %p127 = scmp.eq.s32.totalorder %s23, 0
      %p128 = por %p126, %p127
      %p129 = scmp.ne.s32.totalorder %s117, %s118
      %p130 = scmp.eq.s32.totalorder %s24, 1
      %p131 = por %p129, %p130
      %p133 = scmp.ne.s32.totalorder %s118, %s132
      %p134 = scmp.eq.s32.totalorder %s24, 0
      %p135 = por %p133, %p134
      %s137 = sadd.s32 %s136, 1
      %p140 = scmp.eq.s32.totalorder %s18, 1
      %p141 = scmp.ne.s32.totalorder %s136, %s138
      %p142 = scmp.eq.s32.totalorder %s18, 0
      %p143 = por %p141, %p142
      %p144 = scmp.ne.s32.totalorder %s136, %s138
      %p145 = scmp.eq.s32.totalorder %s23, 1
      %p146 = por %p144, %p145
      %p147 = scmp.ne.s32.totalorder %s138, %s139
      %p148 = scmp.eq.s32.totalorder %s23, 0
      %p149 = por %p147, %p148
      %p150 = scmp.ne.s32.totalorder %s138, %s139
      %p151 = scmp.eq.s32.totalorder %s24, 1
      %p152 = por %p150, %p151
      %p154 = scmp.ne.s32.totalorder %s139, %s153
      %p155 = scmp.eq.s32.totalorder %s24, 0
      %p156 = por %p154, %p155
      %s158 = sadd.s32 %s157, 1
      %p161 = scmp.eq.s32.totalorder %s18, 1
      %p162 = scmp.ne.s32.totalorder %s157, %s159
      %p163 = scmp.eq.s32.totalorder %s18, 0
      %p164 = por %p162, %p163
      %p165 = scmp.ne.s32.totalorder %s157, %s159
      %p166 = scmp.eq.s32.totalorder %s23, 1
      %p167 = por %p165, %p166
      %p168 = scmp.ne.s32.totalorder %s159, %s160
      %p169 = scmp.eq.s32.totalorder %s23, 0
      %p170 = por %p168, %p169
      %p171 = scmp.ne.s32.totalorder %s159, %s160
      %p172 = scmp.eq.s32.totalorder %s24, 1
      %p173 = por %p171, %p172
      %p175 = scmp.ne.s32.totalorder %s160, %s174
      %p176 = scmp.eq.s32.totalorder %s24, 0
      %p177 = por %p175, %p176
      %s178 = ssub.s32 %s18, %s25
      %p179 = scmp.eq.s32.totalorder %s178, 0
      %s181 = sadd.s32 %s180, 1
      %s182 = scalar_select %p179, %s180, %s181
      %p185 = pneg %p179
      %p186 = scmp.eq.s32.totalorder %s18, 1
      %p187 = por %p185, %p186
      %p188 = scmp.ne.s32.totalorder %s180, %s183
      %p189 = scmp.eq.s32.totalorder %s18, 0
      %p190 = por %p188, %p189
      %p191 = scmp.ne.s32.totalorder %s180, %s183
      %p192 = scmp.eq.s32.totalorder %s23, 1
      %p193 = por %p191, %p192
      %p194 = scmp.ne.s32.totalorder %s183, %s184
      %p195 = scmp.eq.s32.totalorder %s23, 0
      %p196 = por %p194, %p195
      %p197 = scmp.ne.s32.totalorder %s183, %s184
      %p198 = scmp.eq.s32.totalorder %s24, 1
      %p199 = por %p197, %p198
      %p201 = scmp.ne.s32.totalorder %s184, %s200
      %p202 = scmp.eq.s32.totalorder %s24, 0
      %p203 = por %p201, %p202
      %p204 = scmp.le.s32.totalorder 1, %s18
      %p205 = scmp.lt.s32.totalorder %s18, 3
      %p206 = pnand %p204, %p205
      %p207 = pneg %p206
      // Predicated region
      $region9: #{tpu_custom_call.1} parent=5 // pred_check
        _
      $region10: #{tpu_custom_call.1} parent=5 // pred_check_branch
        %209 = sbr.rel (%p206) target = $region12
      $region11: #{tpu_custom_call.1} parent=5 // pred_region
        %s210 = ssub.s32 %s18, 1
        // Predicated region
        $region13: #{tpu_custom_call.1} parent=11 // pred_check
          %p211 = pneg %p65
        $region14: #{tpu_custom_call.1} parent=11 // pred_check_branch
          %213 = sbr.rel (%p211) target = $region16
        $region15: #{tpu_custom_call.1} parent=11 // pred_region
          %s215 = ssub.s32 512, 512
          %216 = vsyncadd [#allocation5], %s215
          %s217 = sshll.u32 [#allocation4], 4
          %s218 = int_to_ptr.vmem [resolvable:$true] %s217
          %223 = dma.hbm_to_vmem [thread:$0]  %s1, 512, %s218, [#allocation5], 128, 128, 8
        $region16: #{tpu_custom_call.1} parent=11 // pred_fallthru
          _
        // Predicated region
        $region17: #{tpu_custom_call.1} parent=11 // pred_check
          %p224 = pneg %p86
        $region18: #{tpu_custom_call.1} parent=11 // pred_check_branch
          %226 = sbr.rel (%p224) target = $region20
        $region19: #{tpu_custom_call.1} parent=11 // pred_region
          _
        $region20: #{tpu_custom_call.1} parent=11 // pred_fallthru
          _
        // Predicated region
        $region21: #{tpu_custom_call.1} parent=11 // pred_check
          %p227 = pneg %p107
        $region22: #{tpu_custom_call.1} parent=11 // pred_check_branch
          %229 = sbr.rel (%p227) target = $region24
        $region23: #{tpu_custom_call.1} parent=11 // pred_region
          %s231 = ssub.s32 2048, 2048
          %232 = vsyncadd [#allocation5], %s231
          %s233 = sshll.u32 [#allocation6], 4
          %s234 = int_to_ptr.vmem [resolvable:$true] %s233
          %239 = dma.hbm_to_vmem [thread:$0]  %s3, 2048, %s234, [#allocation5], 128, 128, 8
        $region24: #{tpu_custom_call.1} parent=11 // pred_fallthru
          _
        // Predicated region
        $region25: #{tpu_custom_call.1} parent=11 // pred_check
          %p240 = pneg %p128
        $region26: #{tpu_custom_call.1} parent=11 // pred_check_branch
          %242 = sbr.rel (%p240) target = $region28
        $region27: #{tpu_custom_call.1} parent=11 // pred_region
          _
        $region28: #{tpu_custom_call.1} parent=11 // pred_fallthru
          _
        // Predicated region
        $region29: #{tpu_custom_call.1} parent=11 // pred_check
          %p243 = pneg %p149
        $region30: #{tpu_custom_call.1} parent=11 // pred_check_branch
          %245 = sbr.rel (%p243) target = $region32
        $region31: #{tpu_custom_call.1} parent=11 // pred_region
          %s247 = ssub.s32 2048, 2048
          %248 = vsyncadd [#allocation8], %s247
          %s249 = sshll.u32 [#allocation7], 4
          %s250 = int_to_ptr.vmem [resolvable:$true] %s249
          %255 = dma.hbm_to_vmem [thread:$0]  %s5, 2048, %s250, [#allocation8], 128, 128, 8
        $region32: #{tpu_custom_call.1} parent=11 // pred_fallthru
          _
        // Predicated region
        $region33: #{tpu_custom_call.1} parent=11 // pred_check
          %p256 = pneg %p170
        $region34: #{tpu_custom_call.1} parent=11 // pred_check_branch
          %258 = sbr.rel (%p256) target = $region36
        $region35: #{tpu_custom_call.1} parent=11 // pred_region
          _
        $region36: #{tpu_custom_call.1} parent=11 // pred_fallthru
          _
      $region12: #{tpu_custom_call.1} parent=5 // pred_fallthru
        _
      %p259 = scmp.lt.s32.totalorder %s18, 2
      // Predicated region
      $region37: #{tpu_custom_call.1} parent=5 // pred_check
        %p260 = pneg %p259
      $region38: #{tpu_custom_call.1} parent=5 // pred_check_branch
        %262 = sbr.rel (%p260) target = $region40
      $region39: #{tpu_custom_call.1} parent=5 // pred_region
        // Predicated region
        $region41: #{tpu_custom_call.1} parent=39 // pred_check
          %p263 = pneg %p38
        $region42: #{tpu_custom_call.1} parent=39 // pred_check_branch
          %265 = sbr.rel (%p263) target = $region44
        $region43: #{tpu_custom_call.1} parent=39 // pred_region
          %s266 = sand.u32 %s28, 1
          %s267 = scalar_lea.sflag [#allocation3], %s266
          %s268 = sand.u32 %s28, 1
          %s269 = smul.addr %s268, 8
          %s270 = scalar_lea.vmem [#allocation2], %s269
          %s272 = ssub.s32 128, 128
          %273 = vsyncadd %s267, %s272
          %s274 = smul.addr %s18, 128
          %s275 = scalar_lea.hbm %s0, %s274
          %s277 = sshll.u32 %s270, 4
          %s278 = int_to_ptr.vmem [resolvable:$true] %s277
          %280 = dma.hbm_to_vmem [thread:$0]  %s275, 128, %s278, %s267
        $region44: #{tpu_custom_call.1} parent=39 // pred_fallthru
          _
      $region40: #{tpu_custom_call.1} parent=5 // pred_fallthru
        _
      %p281 = scmp.le.s32.totalorder 1, %s18
      %p282 = scmp.lt.s32.totalorder %s18, 3
      %p283 = pnand %p281, %p282
      %p284 = pneg %p283
      // Predicated region
      $region45: #{tpu_custom_call.1} parent=5 // pred_check
        _
      $region46: #{tpu_custom_call.1} parent=5 // pred_check_branch
        %286 = sbr.rel (%p283) target = $region48
      $region47: #{tpu_custom_call.1} parent=5 // pred_region
        %s287 = ssub.s32 %s18, 1
        %s288 = sand.u32 %s31, 1
        %s289 = scalar_lea.sflag [#allocation3], %s288
        %s290 = sand.u32 %s31, 1
        %s291 = smul.addr %s290, 8
        %s292 = scalar_lea.vmem [#allocation2], %s291
        // Predicated region
        $region49: #{tpu_custom_call.1} parent=47 // pred_check
          %p293 = pneg %p44
        $region50: #{tpu_custom_call.1} parent=47 // pred_check_branch
          %295 = sbr.rel (%p293) target = $region52
        $region51: #{tpu_custom_call.1} parent=47 // pred_region
          %296 = dma.done %s289, 128
        $region52: #{tpu_custom_call.1} parent=47 // pred_fallthru
          _
        // Predicated region
        $region53: #{tpu_custom_call.1} parent=47 // pred_check
          %p297 = pneg %p65
        $region54: #{tpu_custom_call.1} parent=47 // pred_check_branch
          %299 = sbr.rel (%p297) target = $region56
        $region55: #{tpu_custom_call.1} parent=47 // pred_region
          %300 = dma.done [#allocation5], 512
        $region56: #{tpu_custom_call.1} parent=47 // pred_fallthru
          _
        // Predicated region
        $region57: #{tpu_custom_call.1} parent=47 // pred_check
          %p301 = pneg %p107
        $region58: #{tpu_custom_call.1} parent=47 // pred_check_branch
          %303 = sbr.rel (%p301) target = $region60
        $region59: #{tpu_custom_call.1} parent=47 // pred_region
          %304 = dma.done [#allocation5], 2048
        $region60: #{tpu_custom_call.1} parent=47 // pred_fallthru
          _
        // Predicated region
        $region61: #{tpu_custom_call.1} parent=47 // pred_check
          %p305 = pneg %p149
        $region62: #{tpu_custom_call.1} parent=47 // pred_check_branch
          %307 = sbr.rel (%p305) target = $region64
        $region63: #{tpu_custom_call.1} parent=47 // pred_region
          %308 = dma.done [#allocation8], 2048
        $region64: #{tpu_custom_call.1} parent=47 // pred_fallthru
          _
        %s309 = sand.u32 %s31, 1
        %s310 = scalar_lea.sflag [#allocation3], %s309
        %s311 = sand.u32 %s31, 1
        %s312 = smul.addr %s311, 8
        %s313 = scalar_lea.vmem [#allocation2], %s312
        %p314 = pneg %p44
        %p315 = pneg %p41
        %p316 = pneg %p65
        %p317 = pneg %p62
        %p318 = pneg %p86
        %p319 = pneg %p83
        %p320 = pneg %p107
        %p321 = pneg %p104
        %p322 = pneg %p128
        %p323 = pneg %p125
        %p324 = pneg %p149
        %p325 = pneg %p146
        %p326 = pneg %p170
        %p327 = pneg %p167
        %p328 = pneg %p196
        %p329 = pneg %p193
        %p330 = scmp.lt.s32.totalorder %s23, 1
        %s331 = scalar_select %p330, %s23, 1
        %s332 = smul.addr %s331, 8
        %s333 = scalar_lea.vmem %s7, %s332
        %p334 = scmp.lt.s32.totalorder %s23, 1
        %s335 = scalar_select %p334, %s23, 1
        %s336 = smul.addr %s335, 8
        %s337 = scalar_lea.vmem %s7, %s336
        %v338 = vld [vmem:[%s292] sm:$0xff]
        %v339 = vld [vmem:[#allocation4] sm:$0xff]
        %v340 = vld [vmem:[#allocation4 + $0x8] sm:$0xff]
        %v341 = vld [vmem:[#allocation4 + $0x10] sm:$0xff]
        %v342 = vld [vmem:[#allocation4 + $0x18] sm:$0xff]
        %vm343 = vcmask 261120
        %v345 = vsel %vm343, %v338, 0
        %347 = vmatprep.subr.mxu0 0.0
        %348 = vmatpush1.msra.mxu0 %v339
        %349 = vmatprep.subr.mxu0 0.0
        %350 = vmatpush1.msra.mxu0 %v340
        %351 = vmatprep.subr.mxu0 0.0
        %352 = vmatpush1.msra.mxu0 %v341
        %353 = vmatprep.subr.mxu0 0.0
        %354 = vmatpush1.msra.mxu0 %v342
        %355 = vmatprep.subr.mxu0 0.0
        %356 = vmatpush1.msra.mxu0 0.0
        %357 = vmatprep.subr.mxu0 0.0
        %358 = vmatpush1.msra.mxu0 0.0
        %359 = vmatprep.subr.mxu0 0.0
        %360 = vmatpush1.msra.mxu0 0.0
        %361 = vmatprep.subr.mxu0 0.0
        %362 = vmatpush1.msra.mxu0 0.0
        %363 = vmatprep.subr.mxu0 0.0
        %364 = vmatpush1.msra.mxu0 0.0
        %365 = vmatprep.subr.mxu0 0.0
        %366 = vmatpush1.msra.mxu0 0.0
        %367 = vmatprep.subr.mxu0 0.0
        %368 = vmatpush1.msra.mxu0 0.0
        %369 = vmatprep.subr.mxu0 0.0
        %370 = vmatpush1.msra.mxu0 0.0
        %371 = vmatprep.subr.mxu0 0.0
        %372 = vmatpush1.msra.mxu0 0.0
        %373 = vmatprep.subr.mxu0 0.0
        %374 = vmatpush1.msra.mxu0 0.0
        %375 = vmatprep.subr.mxu0 0.0
        %376 = vmatpush1.msra.mxu0 0.0
        %377 = vmatprep.subr.mxu0 0.0
        %378 = vmatpush1.msra.mxu0 0.0
        %379 = vmatprep.subr.mxu0 0.0
        %380 = vmatpush1.msra.mxu0 0.0
        %381 = vmatprep.subr.mxu0 0.0
        %382 = vmatpush1.msra.mxu0 0.0
        %383 = vmatprep.subr.mxu0 0.0
        %384 = vmatpush1.msra.mxu0 0.0
        %385 = vmatprep.subr.mxu0 0.0
        %386 = vmatpush1.msra.mxu0 0.0
        %387 = vmatprep.subr.mxu0 0.0
        %388 = vmatpush1.msra.mxu0 0.0
        %389 = vmatprep.subr.mxu0 0.0
        %390 = vmatpush1.msra.mxu0 0.0
        %391 = vmatprep.subr.mxu0 0.0
        %392 = vmatpush1.msra.mxu0 0.0
        %393 = vmatprep.subr.mxu0 0.0
        %394 = vmatpush1.msra.mxu0 0.0
        %395 = vmatprep.subr.mxu0 0.0
        %396 = vmatpush1.msra.mxu0 0.0
        %397 = vmatprep.subr.mxu0 0.0
        %398 = vmatpush1.msra.mxu0 0.0
        %399 = vmatprep.subr.mxu0 0.0
        %400 = vmatpush1.msra.mxu0 0.0
        %401 = vmatprep.subr.mxu0 0.0
        %402 = vmatpush1.msra.mxu0 0.0
        %403 = vmatprep.subr.mxu0 0.0
        %404 = vmatpush1.msra.mxu0 0.0
        %405 = vmatprep.subr.mxu0 0.0
        %406 = vmatpush1.msra.mxu0 0.0
        %407 = vmatprep.subr.mxu0 0.0
        %408 = vmatpush1.msra.mxu0 0.0
        %409 = vmatprep.subr.mxu0 0.0
        %410 = vmatpush1.msra.mxu0 0.0
        %411 = vmatprep.mubr.f32.mxu0 0.0
        %412 = vmatmul.mubr.f32.gmra.mrb[0].mxu0 %v345
        %v413 = vpop.f32.mrb[0].mxu0
        %v414 = vadd.f32 0.0, %v413
        %v415 = vpop.f32.mrb[0].mxu0
        %416 = vdwg.mxu0
        %v417 = vld [vmem:[%s2] sm:$0x1]
        %v419 = vlaneseq
        %v420 = vshrl.u32 %v419, 7
        %v421 = vsub.s32 0, %v420
        %v422 = vrot.slane %v417, %v421
        %vm424 = vcmp.ge.f32.partialorder %v414, %v422
        %v425 = vsel %vm424, 1, 0
        %v426 = vcvt.s32.f32 %v425
        %v427 = vld [vmem:[#allocation6] sm:$0xff]
        %v428 = vld [vmem:[#allocation6 + $0x8] sm:$0xff]
        %v429 = vld [vmem:[#allocation6 + $0x10] sm:$0xff]
        %v430 = vld [vmem:[#allocation6 + $0x18] sm:$0xff]
        %v431 = vld [vmem:[#allocation6 + $0x20] sm:$0xff]
        %v432 = vld [vmem:[#allocation6 + $0x28] sm:$0xff]
        %v433 = vld [vmem:[#allocation6 + $0x30] sm:$0xff]
        %v434 = vld [vmem:[#allocation6 + $0x38] sm:$0xff]
        %v435 = vld [vmem:[#allocation6 + $0x40] sm:$0xff]
        %v436 = vld [vmem:[#allocation6 + $0x48] sm:$0xff]
        %v437 = vld [vmem:[#allocation6 + $0x50] sm:$0xff]
        %v438 = vld [vmem:[#allocation6 + $0x58] sm:$0xff]
        %v439 = vld [vmem:[#allocation6 + $0x60] sm:$0xff]
        %v440 = vld [vmem:[#allocation6 + $0x68] sm:$0xff]
        %v441 = vld [vmem:[#allocation6 + $0x70] sm:$0xff]
        %v442 = vld [vmem:[#allocation6 + $0x78] sm:$0xff]
        %443 = vmatprep.subr.mxu0 0.0
        %444 = vmatpush1.msra.mxu0 %v427
        %445 = vmatprep.subr.mxu0 0.0
        %446 = vmatpush1.msra.mxu0 %v428
        %447 = vmatprep.subr.mxu0 0.0
        %448 = vmatpush1.msra.mxu0 %v429
        %449 = vmatprep.subr.mxu0 0.0
        %450 = vmatpush1.msra.mxu0 %v430
        %451 = vmatprep.subr.mxu0 0.0
        %452 = vmatpush1.msra.mxu0 %v431
        %453 = vmatprep.subr.mxu0 0.0
        %454 = vmatpush1.msra.mxu0 %v432
        %455 = vmatprep.subr.mxu0 0.0
        %456 = vmatpush1.msra.mxu0 %v433
        %457 = vmatprep.subr.mxu0 0.0
        %458 = vmatpush1.msra.mxu0 %v434
        %459 = vmatprep.subr.mxu0 0.0
        %460 = vmatpush1.msra.mxu0 %v435
        %461 = vmatprep.subr.mxu0 0.0
        %462 = vmatpush1.msra.mxu0 %v436
        %463 = vmatprep.subr.mxu0 0.0
        %464 = vmatpush1.msra.mxu0 %v437
        %465 = vmatprep.subr.mxu0 0.0
        %466 = vmatpush1.msra.mxu0 %v438
        %467 = vmatprep.subr.mxu0 0.0
        %468 = vmatpush1.msra.mxu0 %v439
        %469 = vmatprep.subr.mxu0 0.0
        %470 = vmatpush1.msra.mxu0 %v440
        %471 = vmatprep.subr.mxu0 0.0
        %472 = vmatpush1.msra.mxu0 %v441
        %473 = vmatprep.subr.mxu0 0.0
        %474 = vmatpush1.msra.mxu0 %v442
        %475 = vmatprep.subr.mxu0 0.0
        %476 = vmatpush1.msra.mxu0 0.0
        %477 = vmatprep.subr.mxu0 0.0
        %478 = vmatpush1.msra.mxu0 0.0
        %479 = vmatprep.subr.mxu0 0.0
        %480 = vmatpush1.msra.mxu0 0.0
        %481 = vmatprep.subr.mxu0 0.0
        %482 = vmatpush1.msra.mxu0 0.0
        %483 = vmatprep.subr.mxu0 0.0
        %484 = vmatpush1.msra.mxu0 0.0
        %485 = vmatprep.subr.mxu0 0.0
        %486 = vmatpush1.msra.mxu0 0.0
        %487 = vmatprep.subr.mxu0 0.0
        %488 = vmatpush1.msra.mxu0 0.0
        %489 = vmatprep.subr.mxu0 0.0
        %490 = vmatpush1.msra.mxu0 0.0
        %491 = vmatprep.subr.mxu0 0.0
        %492 = vmatpush1.msra.mxu0 0.0
        %493 = vmatprep.subr.mxu0 0.0
        %494 = vmatpush1.msra.mxu0 0.0
        %495 = vmatprep.subr.mxu0 0.0
        %496 = vmatpush1.msra.mxu0 0.0
        %497 = vmatprep.subr.mxu0 0.0
        %498 = vmatpush1.msra.mxu0 0.0
        %499 = vmatprep.subr.mxu0 0.0
        %500 = vmatpush1.msra.mxu0 0.0
        %501 = vmatprep.subr.mxu0 0.0
        %502 = vmatpush1.msra.mxu0 0.0
        %503 = vmatprep.subr.mxu0 0.0
        %504 = vmatpush1.msra.mxu0 0.0
        %505 = vmatprep.subr.mxu0 0.0
        %506 = vmatpush1.msra.mxu0 0.0
        %507 = vmatprep.mubr.f32.mxu0 0.0
        %508 = vmatmul.mubr.f32.gmra.mrb[0].mxu0 %v426
        %v509 = vpop.f32.mrb[0].mxu0
        %v510 = vadd.f32 0.0, %v509
        %v511 = vpop.f32.mrb[0].mxu0
        %512 = vdwg.mxu0
        %v513 = vld [vmem:[%s4] sm:$0x1]
        %v515 = vlaneseq
        %v516 = vshrl.u32 %v515, 7
        %v517 = vsub.s32 0, %v516
        %v518 = vrot.slane %v513, %v517
        %vm520 = vcmp.ge.f32.partialorder %v510, %v518
        %v521 = vsel %vm520, 1, 0
        %v522 = vcvt.s32.f32 %v521
        %v523 = vld [vmem:[#allocation7] sm:$0xff]
        %v524 = vld [vmem:[#allocation7 + $0x8] sm:$0xff]
        %v525 = vld [vmem:[#allocation7 + $0x10] sm:$0xff]
        %v526 = vld [vmem:[#allocation7 + $0x18] sm:$0xff]
        %v527 = vld [vmem:[#allocation7 + $0x20] sm:$0xff]
        %v528 = vld [vmem:[#allocation7 + $0x28] sm:$0xff]
        %v529 = vld [vmem:[#allocation7 + $0x30] sm:$0xff]
        %v530 = vld [vmem:[#allocation7 + $0x38] sm:$0xff]
        %v531 = vld [vmem:[#allocation7 + $0x40] sm:$0xff]
        %v532 = vld [vmem:[#allocation7 + $0x48] sm:$0xff]
        %v533 = vld [vmem:[#allocation7 + $0x50] sm:$0xff]
        %v534 = vld [vmem:[#allocation7 + $0x58] sm:$0xff]
        %v535 = vld [vmem:[#allocation7 + $0x60] sm:$0xff]
        %v536 = vld [vmem:[#allocation7 + $0x68] sm:$0xff]
        %v537 = vld [vmem:[#allocation7 + $0x70] sm:$0xff]
        %v538 = vld [vmem:[#allocation7 + $0x78] sm:$0xff]
        %539 = vmatprep.subr.mxu0 0.0
        %540 = vmatpush1.msra.mxu0 %v523
        %541 = vmatprep.subr.mxu0 0.0
        %542 = vmatpush1.msra.mxu0 %v524
        %543 = vmatprep.subr.mxu0 0.0
        %544 = vmatpush1.msra.mxu0 %v525
        %545 = vmatprep.subr.mxu0 0.0
        %546 = vmatpush1.msra.mxu0 %v526
        %547 = vmatprep.subr.mxu0 0.0
        %548 = vmatpush1.msra.mxu0 %v527
        %549 = vmatprep.subr.mxu0 0.0
        %550 = vmatpush1.msra.mxu0 %v528
        %551 = vmatprep.subr.mxu0 0.0
        %552 = vmatpush1.msra.mxu0 %v529
        %553 = vmatprep.subr.mxu0 0.0
        %554 = vmatpush1.msra.mxu0 %v530
        %555 = vmatprep.subr.mxu0 0.0
        %556 = vmatpush1.msra.mxu0 %v531
        %557 = vmatprep.subr.mxu0 0.0
        %558 = vmatpush1.msra.mxu0 %v532
        %559 = vmatprep.subr.mxu0 0.0
        %560 = vmatpush1.msra.mxu0 %v533
        %561 = vmatprep.subr.mxu0 0.0
        %562 = vmatpush1.msra.mxu0 %v534
        %563 = vmatprep.subr.mxu0 0.0
        %564 = vmatpush1.msra.mxu0 %v535
        %565 = vmatprep.subr.mxu0 0.0
        %566 = vmatpush1.msra.mxu0 %v536
        %567 = vmatprep.subr.mxu0 0.0
        %568 = vmatpush1.msra.mxu0 %v537
        %569 = vmatprep.subr.mxu0 0.0
        %570 = vmatpush1.msra.mxu0 %v538
        %571 = vmatprep.subr.mxu0 0.0
        %572 = vmatpush1.msra.mxu0 0.0
        %573 = vmatprep.subr.mxu0 0.0
        %574 = vmatpush1.msra.mxu0 0.0
        %575 = vmatprep.subr.mxu0 0.0
        %576 = vmatpush1.msra.mxu0 0.0
        %577 = vmatprep.subr.mxu0 0.0
        %578 = vmatpush1.msra.mxu0 0.0
        %579 = vmatprep.subr.mxu0 0.0
        %580 = vmatpush1.msra.mxu0 0.0
        %581 = vmatprep.subr.mxu0 0.0
        %582 = vmatpush1.msra.mxu0 0.0
        %583 = vmatprep.subr.mxu0 0.0
        %584 = vmatpush1.msra.mxu0 0.0
        %585 = vmatprep.subr.mxu0 0.0
        %586 = vmatpush1.msra.mxu0 0.0
        %587 = vmatprep.subr.mxu0 0.0
        %588 = vmatpush1.msra.mxu0 0.0
        %589 = vmatprep.subr.mxu0 0.0
        %590 = vmatpush1.msra.mxu0 0.0
        %591 = vmatprep.subr.mxu0 0.0
        %592 = vmatpush1.msra.mxu0 0.0
        %593 = vmatprep.subr.mxu0 0.0
        %594 = vmatpush1.msra.mxu0 0.0
        %595 = vmatprep.subr.mxu0 0.0
        %596 = vmatpush1.msra.mxu0 0.0
        %597 = vmatprep.subr.mxu0 0.0
        %598 = vmatpush1.msra.mxu0 0.0
        %599 = vmatprep.subr.mxu0 0.0
        %600 = vmatpush1.msra.mxu0 0.0
        %601 = vmatprep.subr.mxu0 0.0
        %602 = vmatpush1.msra.mxu0 0.0
        %603 = vmatprep.mubr.f32.mxu0 0.0
        %604 = vmatmul.mubr.f32.gmra.mrb[0].mxu0 %v522
        %v605 = vpop.f32.mrb[0].mxu0
        %v606 = vadd.f32 0.0, %v605
        %v607 = vpop.f32.mrb[0].mxu0
        %608 = vdwg.mxu0
        %v609 = vld [vmem:[%s6] sm:$0x1]
        %v611 = vlaneseq
        %v612 = vshrl.u32 %v611, 7
        %v613 = vsub.s32 0, %v612
        %v614 = vrot.slane %v609, %v613
        %v616 = vadd.f32 %v606, %v614
        %vm617 = vcmask 31744
        %618 = vst.msk [vmem:[%s337] sm:$0xff] %vm617, %v616
        %p619 = scmp.lt.s32.totalorder %s23, 1
        %s620 = scalar_select %p619, %s23, 1
        %s621 = smul.addr %s620, 8
        %s622 = scalar_lea.vmem %s7, %s621
        // Predicated region
        $region65: #{tpu_custom_call.1} parent=47 // pred_check
          %p623 = pneg %p193
        $region66: #{tpu_custom_call.1} parent=47 // pred_check_branch
          %625 = sbr.rel (%p623) target = $region68
        $region67: #{tpu_custom_call.1} parent=47 // pred_region
          _
        $region68: #{tpu_custom_call.1} parent=47 // pred_fallthru
          _
      $region48: #{tpu_custom_call.1} parent=5 // pred_fallthru
        _
      %p626 = scmp.le.s32.totalorder 2, %s18
      // Predicated region
      $region69: #{tpu_custom_call.1} parent=5 // pred_check
        %p627 = pneg %p626
      $region70: #{tpu_custom_call.1} parent=5 // pred_check_branch
        %629 = sbr.rel (%p627) target = $region72
      $region71: #{tpu_custom_call.1} parent=5 // pred_region
        %s630 = ssub.s32 %s18, 2
        // Predicated region
        $region73: #{tpu_custom_call.1} parent=71 // pred_check
          %p631 = pneg %p199
        $region74: #{tpu_custom_call.1} parent=71 // pred_check_branch
          %633 = sbr.rel (%p631) target = $region76
        $region75: #{tpu_custom_call.1} parent=71 // pred_region
          %p634 = scmp.lt.s32.totalorder %s24, 1
          %s635 = scalar_select %p634, %s24, 1
          %s636 = smul.addr %s635, 8
          %s637 = scalar_lea.vmem %s7, %s636
        $region76: #{tpu_custom_call.1} parent=71 // pred_fallthru
          _
      $region72: #{tpu_custom_call.1} parent=5 // pred_fallthru
        _
    $region6: #{tpu_custom_call.1} parent=1 // loop_footer
      %s22 = sadd.s32 1, %s18
    $region7: #{tpu_custom_call.1} parent=1 // loop_footer_branch
      %17 = sbr.rel target = $region3
    $region8: #{tpu_custom_call.1} parent=1 // loop_exit
      _
    %638 = vsyncpa [#allocation3], 1
    %s639 = scalar_lea.sflag [#allocation3], 1
    %640 = vsyncpa %s639, 1
    %641 = vsyncpa [#allocation5], 1
    %642 = vsyncpa [#allocation8], 1

</llo_original>
